<compile_context>
chip_gen: v7x
topology: tpu7x:2x2x1
jax: 0.10.0
libtpu: 0.0.40
codegen_flags: <defaults>
</compile_context>

<pallas_src>
import jax
import jax.numpy as jnp
from jax.experimental import pallas as pl
from jax.experimental.pallas import tpu as pltpu


def _choose_cb(C, HW, itemsize, target_bytes=2 << 20, unroll_cap=128):
    """Pick a channel-block size Cb that divides C, respects sublane packing,
    and keeps the (1, Cb, HW) block around a couple of MiB."""
    # Whole channel axis in one block when it is small enough (also sidesteps
    # the sublane-divisibility rule, since a full-extent dim is always legal).
    if C * HW * itemsize <= target_bytes and C <= unroll_cap:
        return C
    sub = max(1, 32 // itemsize)  # sublane multiple: 8 (f32), 16 (bf16), 32 (i8)
    best = 1
    for cb in range(1, C):
        if C % cb:
            continue
        if cb != 1 and cb % sub:
            continue
        if cb > unroll_cap or cb * HW * itemsize > target_bytes:
            continue
        best = max(best, cb)
    return best


def _make_flip_kernel(cb):
    def kernel(x_ref, o_ref):
        # Reverse the cb channels inside this block; the block-level reversal
        # across channel blocks is handled by the output BlockSpec index_map.
        # Each statement is a full-lane-width (1, 1, HW) slab copy.
        for j in range(cb):
            o_ref[:, j, :] = x_ref[:, cb - 1 - j, :]
    return kernel


def flip_channels(x):
    """Equivalent of torch.flip(x, [1]) for a tensor with ndim >= 2."""
    orig_shape = x.shape
    assert x.ndim >= 2, "flip along dim 1 needs at least 2 dims"
    N, C = orig_shape[0], orig_shape[1]
    HW = 1
    for d in orig_shape[2:]:
        HW *= d

    # Pure-metadata reshape: (N, C, *spatial) -> (N, C, H*W).  Makes the last
    # BlockSpec dim the full (lane-dense) flattened spatial extent.
    x3 = x.reshape(N, C, HW)

    itemsize = x.dtype.itemsize
    cb = _choose_cb(C, HW, itemsize)
    nc = C // cb  # number of channel blocks (cb always divides C)

    out3 = pl.pallas_call(
        _make_flip_kernel(cb),
        out_shape=jax.ShapeDtypeStruct((N, C, HW), x.dtype),
        grid=(N, nc),
        in_specs=[
            pl.BlockSpec((1, cb, HW), lambda n, c: (n, c, 0)),
        ],
        # Channel-block reversal: input block c -> output block nc-1-c.
        out_specs=pl.BlockSpec((1, cb, HW), lambda n, c: (n, nc - 1 - c, 0)),
        compiler_params=pltpu.CompilerParams(
            # Every grid step writes a disjoint output block -> both axes are
            # parallel (lets v7x shard across its 2 TensorCores).
            dimension_semantics=("parallel", "parallel"),
        ),
        cost_estimate=pl.CostEstimate(
            flops=0,
            transcendentals=0,
            bytes_accessed=2 * x.size * itemsize,
        ),
    )(x3)

    return out3.reshape(orig_shape)


if __name__ == "__main__":
    key = jax.random.PRNGKey(0)
    # Small NCHW shape consistent with the module's forward:
    # batch=2, channels=4, spatial=16x16.
    x = jax.random.normal(key, (2, 4, 16, 16), dtype=jnp.float32)

    out = flip_channels(x)
    out = jax.block_until_ready(out)

    # Reference check against plain-JAX flip (== torch.flip(x, [1]) semantics).
    ref = jnp.flip(x, axis=1)
    assert out.shape == ref.shape and out.dtype == ref.dtype
    assert jnp.array_equal(out, ref), "Pallas flip does not match reference"

    print("KERNEL_OK")
</pallas_src>

<mosaic_0001>
module attributes {stable_mosaic.version = 11 : i64} {
  func.func @kernel(%arg0: i32, %arg1: i32, %arg2: memref<1x4x256xf32, #tpu.memory_space<vmem>>, %arg3: memref<1x4x256xf32, #tpu.memory_space<vmem>>) attributes {dimension_semantics = [#tpu.dimension_semantics<parallel>, #tpu.dimension_semantics<parallel>], iteration_bounds = array<i64: 2, 1>, scalar_prefetch = 0 : i64, scratch_operands = 0 : i64, tpu.core_type = #tpu.core_type<tc>, window_params = [{transform_indices = @transform_0, window_bounds = array<i64: 1, 4, 256>}, {transform_indices = @transform_1, window_bounds = array<i64: 1, 4, 256>}]} {
    %c0 = arith.constant 0 : index
    %c3 = arith.constant 3 : index
    %c0_0 = arith.constant 0 : index
    %0 = vector.load %arg2[%c0, %c3, %c0_0] : memref<1x4x256xf32, #tpu.memory_space<vmem>>, vector<1x1x256xf32>
    %1 = vector.shape_cast %0 : vector<1x1x256xf32> to vector<1x256xf32>
    %c0_1 = arith.constant 0 : index
    %c0_2 = arith.constant 0 : index
    %c0_3 = arith.constant 0 : index
    %2 = vector.load %arg3[%c0_1, %c0_2, %c0_3] : memref<1x4x256xf32, #tpu.memory_space<vmem>>, vector<1x1x256xf32>
    %3 = vector.shape_cast %2 : vector<1x1x256xf32> to vector<1x256xf32>
    %4 = vector.shape_cast %1 : vector<1x256xf32> to vector<1x1x256xf32>
    tpu.vector_store %arg3[%c0_1, %c0_2, %c0_3], %4 {strides = array<i32>} : memref<1x4x256xf32, #tpu.memory_space<vmem>>, vector<1x1x256xf32>,
    %c0_4 = arith.constant 0 : index
    %c2 = arith.constant 2 : index
    %c0_5 = arith.constant 0 : index
    %5 = vector.load %arg2[%c0_4, %c2, %c0_5] : memref<1x4x256xf32, #tpu.memory_space<vmem>>, vector<1x1x256xf32>
    %6 = vector.shape_cast %5 : vector<1x1x256xf32> to vector<1x256xf32>
    %c0_6 = arith.constant 0 : index
    %c1 = arith.constant 1 : index
    %c0_7 = arith.constant 0 : index
    %7 = vector.load %arg3[%c0_6, %c1, %c0_7] : memref<1x4x256xf32, #tpu.memory_space<vmem>>, vector<1x1x256xf32>
    %8 = vector.shape_cast %7 : vector<1x1x256xf32> to vector<1x256xf32>
    %9 = vector.shape_cast %6 : vector<1x256xf32> to vector<1x1x256xf32>
    tpu.vector_store %arg3[%c0_6, %c1, %c0_7], %9 {strides = array<i32>} : memref<1x4x256xf32, #tpu.memory_space<vmem>>, vector<1x1x256xf32>,
    %c0_8 = arith.constant 0 : index
    %c1_9 = arith.constant 1 : index
    %c0_10 = arith.constant 0 : index
    %10 = vector.load %arg2[%c0_8, %c1_9, %c0_10] : memref<1x4x256xf32, #tpu.memory_space<vmem>>, vector<1x1x256xf32>
    %11 = vector.shape_cast %10 : vector<1x1x256xf32> to vector<1x256xf32>
    %c0_11 = arith.constant 0 : index
    %c2_12 = arith.constant 2 : index
    %c0_13 = arith.constant 0 : index
    %12 = vector.load %arg3[%c0_11, %c2_12, %c0_13] : memref<1x4x256xf32, #tpu.memory_space<vmem>>, vector<1x1x256xf32>
    %13 = vector.shape_cast %12 : vector<1x1x256xf32> to vector<1x256xf32>
    %14 = vector.shape_cast %11 : vector<1x256xf32> to vector<1x1x256xf32>
    tpu.vector_store %arg3[%c0_11, %c2_12, %c0_13], %14 {strides = array<i32>} : memref<1x4x256xf32, #tpu.memory_space<vmem>>, vector<1x1x256xf32>,
    %c0_14 = arith.constant 0 : index
    %c0_15 = arith.constant 0 : index
    %c0_16 = arith.constant 0 : index
    %15 = vector.load %arg2[%c0_14, %c0_15, %c0_16] : memref<1x4x256xf32, #tpu.memory_space<vmem>>, vector<1x1x256xf32>
    %16 = vector.shape_cast %15 : vector<1x1x256xf32> to vector<1x256xf32>
    %c0_17 = arith.constant 0 : index
    %c3_18 = arith.constant 3 : index
    %c0_19 = arith.constant 0 : index
    %17 = vector.load %arg3[%c0_17, %c3_18, %c0_19] : memref<1x4x256xf32, #tpu.memory_space<vmem>>, vector<1x1x256xf32>
    %18 = vector.shape_cast %17 : vector<1x1x256xf32> to vector<1x256xf32>
    %19 = vector.shape_cast %16 : vector<1x256xf32> to vector<1x1x256xf32>
    tpu.vector_store %arg3[%c0_17, %c3_18, %c0_19], %19 {strides = array<i32>} : memref<1x4x256xf32, #tpu.memory_space<vmem>>, vector<1x1x256xf32>,
    return
  }
  func.func @transform_0(%arg0: i32, %arg1: i32) -> (i32, i32, i32) {
    %c0_i32 = arith.constant 0 : i32
    %c0_i32_0 = arith.constant 0 : i32
    return %arg0, %arg1, %c0_i32 : i32, i32, i32
  }
  func.func @transform_1(%arg0: i32, %arg1: i32) -> (i32, i32, i32) {
    %c0_i32 = arith.constant 0 : i32
    %0 = arith.subi %c0_i32, %arg1 : i32
    %c0_i32_0 = arith.constant 0 : i32
    %c0_i32_1 = arith.constant 0 : i32
    return %arg0, %0, %c0_i32_0 : i32, i32, i32
  }
}

</mosaic_0001>

<llo_original>
// kernel: tpu_custom_call.1
$region0: #{tpu_custom_call.1}
  #allocation0 [shape = 'u32[]', space=smem, size = 0x4, offset = 0x4, fixed_abs, tag = 'smem constant byte address 0x4 - core index']
  #allocation1 [shape = 'u32[144,128]{1,0:T(1,128)}', space=vmem, size = 0x12000, scoped, tag = 'internal scratch']
  %s0 = inlined_call_operand.hbm [shape: f32[2,4,256], index: 0, kind: input, shape index: {}]
  %s1 = inlined_call_operand.hbm [shape: f32[2,4,256], index: 1, kind: output, shape index: {}]
  %s2 = sld [smem:[#allocation0]]
  $region41: #{tpu_custom_call.1} parent=0
    _
  %s4 = ssub.s32 1, %s2
  %s5 = scalar_select 0, %s4, %s2
  $region1: #{tpu_custom_call.1} parent=0
    #allocation2 [shape = 'u8[8192]{0}', space=vmem, size = 0x2000, scoped, tag = 'input window, operand 0']
    #allocation3 [shape = 's32[2]{0}', space=sflag, size = 0x8, scoped, tag = 'scoped memory for tpu_custom_call.1']
    #allocation4 [shape = 's32[2]{0}', space=sflag, size = 0x8, scoped, tag = 'scoped memory for tpu_custom_call.1']
    #allocation5 [shape = 'u8[8192]{0}', space=vmem, size = 0x2000, scoped, tag = 'output window, operand 0']
    %6 = vsyncpa [#allocation3], 0
    %s7 = scalar_lea.sflag [#allocation3], 1
    %8 = vsyncpa %s7, 0
    %9 = vsyncpa [#allocation4], 0
    %s10 = scalar_lea.sflag [#allocation4], 1
    %11 = vsyncpa %s10, 0
    loop: start=0, step=1, limit=4
    $region2: #{tpu_custom_call.1} parent=1 // loop_pre_header
      _
    $region3: #{tpu_custom_call.1} parent=1 // loop_header
      %s13 = sphi 0, %s17
      %p14 = scmp.ge.s32.totalorder %s13, 4
      %s20 = sphi 0, %s32
      %s21 = sphi 0, %s28
      %s22 = sphi 0, %s20
      %s23 = sphi 0, %s21
      %s24 = sphi 0, %s22
      %s25 = sphi 0, %s23
      %s37 = sphi 0, %s39
      %s40 = sphi 0, %s37
      %s41 = sphi 0, %s40
      %s57 = sphi 0, %s41
      %s67 = sphi 0, %s69
      %s70 = sphi 0, %s67
      %s71 = sphi 0, %s70
      %s87 = sphi 0, %s71
    $region4: #{tpu_custom_call.1} parent=1 // loop_header_branch
      %16 = sbr.rel (%p14) target = $region8
    $region5: #{tpu_custom_call.1} parent=1 // loop_body
      %s18 = ssub.s32 %s13, 1
      %s19 = ssub.s32 %s13, 2
      %s26 = sadd.s32 1, %s21
      %p27 = scmp.ge.s32.totalorder %s26, 1
      %s28 = scalar_select %p27, 0, %s26
      %s29 = sadd.s32 1, %s20
      %s30 = scalar_select %p27, %s29, %s20
      %p31 = scmp.ge.s32.totalorder %s30, 2
      %s32 = scalar_select %p31, 0, %s30
      %s33 = ssub.s32 %s20, %s32
      %s34 = ssub.s32 %s21, %s28
      %s35 = sor.u32 %s33, %s34
      %p36 = scmp.eq.s32.totalorder %s35, 0
      %s38 = sadd.s32 %s37, 1
      %s39 = scalar_select %p36, %s37, %s38
      %p42 = pneg %p36
      %p43 = scmp.eq.s32.totalorder %s13, 1
      %p44 = por %p42, %p43
      %p45 = scmp.ne.s32.totalorder %s37, %s40
      %p46 = scmp.eq.s32.totalorder %s13, 0
      %p47 = por %p45, %p46
      %p48 = scmp.ne.s32.totalorder %s37, %s40
      %p49 = scmp.eq.s32.totalorder %s18, 1
      %p50 = por %p48, %p49
      %p51 = scmp.ne.s32.totalorder %s40, %s41
      %p52 = scmp.eq.s32.totalorder %s18, 0
      %p53 = por %p51, %p52
      %p54 = scmp.ne.s32.totalorder %s40, %s41
      %p55 = scmp.eq.s32.totalorder %s19, 1
      %p56 = por %p54, %p55
      %p58 = scmp.ne.s32.totalorder %s41, %s57
      %p59 = scmp.eq.s32.totalorder %s19, 0
      %p60 = por %p58, %p59
      %s61 = ssub.s32 0, %s21
      %s62 = ssub.s32 0, %s28
      %s63 = ssub.s32 %s20, %s32
      %s64 = ssub.s32 %s61, %s62
      %s65 = sor.u32 %s63, %s64
      %p66 = scmp.eq.s32.totalorder %s65, 0
      %s68 = sadd.s32 %s67, 1
      %s69 = scalar_select %p66, %s67, %s68
      %p72 = pneg %p66
      %p73 = scmp.eq.s32.totalorder %s13, 1
      %p74 = por %p72, %p73
      %p75 = scmp.ne.s32.totalorder %s67, %s70
      %p76 = scmp.eq.s32.totalorder %s13, 0
      %p77 = por %p75, %p76
      %p78 = scmp.ne.s32.totalorder %s67, %s70
      %p79 = scmp.eq.s32.totalorder %s18, 1
      %p80 = por %p78, %p79
      %p81 = scmp.ne.s32.totalorder %s70, %s71
      %p82 = scmp.eq.s32.totalorder %s18, 0
      %p83 = por %p81, %p82
      %p84 = scmp.ne.s32.totalorder %s70, %s71
      %p85 = scmp.eq.s32.totalorder %s19, 1
      %p86 = por %p84, %p85
      %p88 = scmp.ne.s32.totalorder %s71, %s87
      %p89 = scmp.eq.s32.totalorder %s19, 0
      %p90 = por %p88, %p89
      %p91 = scmp.le.s32.totalorder 1, %s13
      %p92 = scmp.lt.s32.totalorder %s13, 3
      %p93 = pnand %p91, %p92
      %p94 = pneg %p93
      // Predicated region
      $region9: #{tpu_custom_call.1} parent=5 // pred_check
        _
      $region10: #{tpu_custom_call.1} parent=5 // pred_check_branch
        %96 = sbr.rel (%p93) target = $region12
      $region11: #{tpu_custom_call.1} parent=5 // pred_region
        %s97 = ssub.s32 %s13, 1
      $region12: #{tpu_custom_call.1} parent=5 // pred_fallthru
        _
      %p98 = scmp.lt.s32.totalorder %s13, 2
      // Predicated region
      $region13: #{tpu_custom_call.1} parent=5 // pred_check
        %p99 = pneg %p98
      $region14: #{tpu_custom_call.1} parent=5 // pred_check_branch
        %101 = sbr.rel (%p99) target = $region16
      $region15: #{tpu_custom_call.1} parent=5 // pred_region
        // Predicated region
        $region17: #{tpu_custom_call.1} parent=15 // pred_check
          %p102 = pneg %p47
        $region18: #{tpu_custom_call.1} parent=15 // pred_check_branch
          %104 = sbr.rel (%p102) target = $region20
        $region19: #{tpu_custom_call.1} parent=15 // pred_region
          %s105 = sand.u32 %s37, 1
          %s106 = scalar_lea.sflag [#allocation3], %s105
          %s107 = sand.u32 %s37, 1
          %s108 = smul.addr %s107, 8
          %s109 = scalar_lea.vmem [#allocation2], %s108
          %s111 = ssub.s32 128, 128
          %112 = vsyncadd %s106, %s111
          %s113 = smul.addr %s21, 2
          %s114 = smul.addr %s20, 2
          %s115 = sadd.s32 %s113, %s114
          %s116 = smul.addr %s115, 64
          %s117 = scalar_lea.hbm %s0, %s116
          %s119 = sshll.u32 %s109, 4
          %s120 = int_to_ptr.vmem [resolvable:$true] %s119
          %122 = dma.hbm_to_vmem [thread:$0]  %s117, 128, %s120, %s106
        $region20: #{tpu_custom_call.1} parent=15 // pred_fallthru
          _
      $region16: #{tpu_custom_call.1} parent=5 // pred_fallthru
        _
      %p123 = scmp.le.s32.totalorder 1, %s13
      %p124 = scmp.lt.s32.totalorder %s13, 3
      %p125 = pnand %p123, %p124
      %p126 = pneg %p125
      // Predicated region
      $region21: #{tpu_custom_call.1} parent=5 // pred_check
        _
      $region22: #{tpu_custom_call.1} parent=5 // pred_check_branch
        %128 = sbr.rel (%p125) target = $region24
      $region23: #{tpu_custom_call.1} parent=5 // pred_region
        %s129 = ssub.s32 %s13, 1
        %s130 = sand.u32 %s40, 1
        %s131 = scalar_lea.sflag [#allocation3], %s130
        %s132 = sand.u32 %s40, 1
        %s133 = smul.addr %s132, 8
        %s134 = scalar_lea.vmem [#allocation2], %s133
        // Predicated region
        $region25: #{tpu_custom_call.1} parent=23 // pred_check
          %p135 = pneg %p53
        $region26: #{tpu_custom_call.1} parent=23 // pred_check_branch
          %137 = sbr.rel (%p135) target = $region28
        $region27: #{tpu_custom_call.1} parent=23 // pred_region
          %138 = dma.done %s131, 128
        $region28: #{tpu_custom_call.1} parent=23 // pred_fallthru
          _
        %s139 = sand.u32 %s40, 1
        %s140 = scalar_lea.sflag [#allocation3], %s139
        %s141 = sand.u32 %s40, 1
        %s142 = smul.addr %s141, 8
        %s143 = scalar_lea.vmem [#allocation2], %s142
        %p144 = pneg %p53
        %p145 = pneg %p50
        %p146 = pneg %p83
        %p147 = pneg %p80
        %s148 = sand.u32 %s70, 1
        %s149 = scalar_lea.sflag [#allocation4], %s148
        %s150 = sand.u32 %s70, 1
        %s151 = smul.addr %s150, 8
        %s152 = scalar_lea.vmem [#allocation5], %s151
        %s153 = ssub.s32 0, %s23
        %s154 = scalar_lea.vmem %s134, 3 [#allocation2]
        %v155 = vld [vmem:[%s154] ss:$4 sm:$0x3]
        %v156 = vlaneseq
        %vm157 = vcmp.ge.s32.totalorder %v156, 0
        %vm158 = vcmp.lt.s32.totalorder %v156, 256
        %vm159 = vmand %vm157, %vm158
        %160 = vst.msk [vmem:[%s152] ss:$4 sm:$0x3] %vm159, %v155
        %s161 = scalar_lea.vmem %s134, 2 [#allocation2]
        %v162 = vld [vmem:[%s161] ss:$4 sm:$0x3]
        %s163 = scalar_lea.vmem %s152, 1 [#allocation5]
        %164 = vst.msk [vmem:[%s163] ss:$4 sm:$0x3] %vm159, %v162
        %s165 = scalar_lea.vmem %s134, 1 [#allocation2]
        %v166 = vld [vmem:[%s165] ss:$4 sm:$0x3]
        %s167 = scalar_lea.vmem %s152, 2 [#allocation5]
        %168 = vst.msk [vmem:[%s167] ss:$4 sm:$0x3] %vm159, %v166
        %v169 = vld [vmem:[%s134] ss:$4 sm:$0x3]
        %s170 = scalar_lea.vmem %s152, 3 [#allocation5]
        %171 = vst.msk [vmem:[%s170] ss:$4 sm:$0x3] %vm159, %v169
        %s172 = sand.u32 %s70, 1
        %s173 = scalar_lea.sflag [#allocation4], %s172
        %s174 = sand.u32 %s70, 1
        %s175 = smul.addr %s174, 8
        %s176 = scalar_lea.vmem [#allocation5], %s175
        // Predicated region
        $region29: #{tpu_custom_call.1} parent=23 // pred_check
          %p177 = pneg %p80
        $region30: #{tpu_custom_call.1} parent=23 // pred_check_branch
          %179 = sbr.rel (%p177) target = $region32
        $region31: #{tpu_custom_call.1} parent=23 // pred_region
          %s180 = ssub.s32 0, %s23
          %s182 = ssub.s32 128, 128
          %183 = vsyncadd %s173, %s182
          %s184 = smul.addr %s180, 2
          %s185 = smul.addr %s22, 2
          %s186 = sadd.s32 %s184, %s185
          %s187 = smul.addr %s186, 64
          %s188 = scalar_lea.hbm %s1, %s187
          %s190 = sshll.u32 %s176, 4
          %s191 = int_to_ptr.vmem [resolvable:$true] %s190
          %193 = dma.vmem_to_hbm [thread:$0]  %s191, 128, %s188, %s173
        $region32: #{tpu_custom_call.1} parent=23 // pred_fallthru
          _
      $region24: #{tpu_custom_call.1} parent=5 // pred_fallthru
        _
      %p194 = scmp.le.s32.totalorder 2, %s13
      // Predicated region
      $region33: #{tpu_custom_call.1} parent=5 // pred_check
        %p195 = pneg %p194
      $region34: #{tpu_custom_call.1} parent=5 // pred_check_branch
        %197 = sbr.rel (%p195) target = $region36
      $region35: #{tpu_custom_call.1} parent=5 // pred_region
        %s198 = ssub.s32 %s13, 2
        // Predicated region
        $region37: #{tpu_custom_call.1} parent=35 // pred_check
          %p199 = pneg %p86
        $region38: #{tpu_custom_call.1} parent=35 // pred_check_branch
          %201 = sbr.rel (%p199) target = $region40
        $region39: #{tpu_custom_call.1} parent=35 // pred_region
          %s202 = sand.u32 %s71, 1
          %s203 = scalar_lea.sflag [#allocation4], %s202
          %s204 = sand.u32 %s71, 1
          %s205 = smul.addr %s204, 8
          %s206 = scalar_lea.vmem [#allocation5], %s205
          %207 = dma.done %s203, 128
        $region40: #{tpu_custom_call.1} parent=35 // pred_fallthru
          _
      $region36: #{tpu_custom_call.1} parent=5 // pred_fallthru
        _
    $region6: #{tpu_custom_call.1} parent=1 // loop_footer
      %s17 = sadd.s32 1, %s13
    $region7: #{tpu_custom_call.1} parent=1 // loop_footer_branch
      %12 = sbr.rel target = $region3
    $region8: #{tpu_custom_call.1} parent=1 // loop_exit
      _
    %208 = vsyncpa [#allocation3], 1
    %s209 = scalar_lea.sflag [#allocation3], 1
    %210 = vsyncpa %s209, 1
    %211 = vsyncpa [#allocation4], 1
    %s212 = scalar_lea.sflag [#allocation4], 1
    %213 = vsyncpa %s212, 1

</llo_original>
